<compile_context>
chip_gen: v6e
topology: v6e:2x2x1
jax: 0.10.0
libtpu: 0.0.40
codegen_flags: <defaults>
</compile_context>

<pallas_src>
import functools

import jax
import jax.numpy as jnp
from jax.experimental import pallas as pl
from jax.experimental.pallas import tpu as pltpu


def _round_up(a: int, b: int) -> int:
    return (a + b - 1) // b * b


# ----------------------------------------------------------------------------
# Kernels
# ----------------------------------------------------------------------------
def _compact_kernel(x_ref, w1_ref, b1_ref, w2_ref, b2_ref, w3_ref, b3_ref,
                    out_ref, *, num_logits: int):
    """Both heads packed into one 128-lane hidden tile (2*H <= 128)."""
    x = x_ref[...].astype(jnp.bfloat16)
    h1 = jnp.maximum(
        jnp.dot(x, w1_ref[...], preferred_element_type=jnp.float32) + b1_ref[...], 0.0
    ).astype(jnp.bfloat16)
    # Block-diagonal layer 2 keeps the two heads independent within one matmul.
    h2 = jnp.maximum(
        jnp.dot(h1, w2_ref[...], preferred_element_type=jnp.float32) + b2_ref[...], 0.0
    ).astype(jnp.bfloat16)
    raw = jnp.dot(h2, w3_ref[...], preferred_element_type=jnp.float32) + b3_ref[...]
    lane = jax.lax.broadcasted_iota(jnp.int32, raw.shape, dimension=1)
    # logits lanes stay raw; bbox lanes (and the zero padding, sliced off in
    # the wrapper) go through sigmoid. Sigmoid runs on the EUP slot -> free.
    out_ref[...] = jnp.where(lane < num_logits, raw, jax.nn.sigmoid(raw))


def _wide_kernel(x_ref, w1_ref, b1_ref, cw2_ref, cb2_ref, bw2_ref, bb2_ref,
                 w3_ref, b3_ref, out_ref, *, hidden_pad: int, num_logits: int):
    """Per-head 128-lane-padded hidden tiles (2*H > 128); fused layer 3."""
    x = x_ref[...].astype(jnp.bfloat16)
    # layer 1: both heads fused along the output (N) dimension.
    h1 = jnp.maximum(
        jnp.dot(x, w1_ref[...], preferred_element_type=jnp.float32) + b1_ref[...], 0.0)
    h_cls = h1[:, :hidden_pad].astype(jnp.bfloat16)
    h_box = h1[:, hidden_pad:].astype(jnp.bfloat16)
    # layer 2: one matmul per head (block-diagonal would double FLOPs).
    h2c = jnp.maximum(
        jnp.dot(h_cls, cw2_ref[...], preferred_element_type=jnp.float32) + cb2_ref[...], 0.0)
    h2b = jnp.maximum(
        jnp.dot(h_box, bw2_ref[...], preferred_element_type=jnp.float32) + bb2_ref[...], 0.0)
    # layer 3: single dot with K = 2*Hp against a vertically stacked w3.
    h2 = jnp.concatenate([h2c.astype(jnp.bfloat16), h2b.astype(jnp.bfloat16)], axis=1)
    raw = jnp.dot(h2, w3_ref[...], preferred_element_type=jnp.float32) + b3_ref[...]
    lane = jax.lax.broadcasted_iota(jnp.int32, raw.shape, dimension=1)
    out_ref[...] = jnp.where(lane < num_logits, raw, jax.nn.sigmoid(raw))


# ----------------------------------------------------------------------------
# One-time weight packing (do this at model-load time, NOT per forward call)
# ----------------------------------------------------------------------------
def pack_detector_heads(cls_params, box_params, *, matmul_dtype=jnp.bfloat16):
    """Pack class/bbox 3-layer MLP params into kernel-ready padded blocks."""
    cw1, cb1, cw2, cb2, cw3, cb3 = [jnp.asarray(a, jnp.float32) for a in cls_params]
    bw1, bb1, bw2, bb2, bw3, bb3 = [jnp.asarray(a, jnp.float32) for a in box_params]
    D, H = cw1.shape
    C = cw3.shape[1]           # num_classes + 1
    K = bw3.shape[1]           # 4
    OUT = _round_up(C + K, 128)

    f32 = jnp.float32

    if 2 * H <= 128:
        # ---- compact: both heads in a single 128-lane hidden tile ----
        Hp = 128
        w1 = (jnp.zeros((D, Hp), f32)
              .at[:, :H].set(cw1).at[:, H:2 * H].set(bw1)).astype(matmul_dtype)
        b1 = (jnp.zeros((1, Hp), f32)
              .at[0, :H].set(cb1.reshape(-1)).at[0, H:2 * H].set(bb1.reshape(-1)))
        w2 = (jnp.zeros((Hp, Hp), f32)
              .at[:H, :H].set(cw2).at[H:2 * H, H:2 * H].set(bw2)).astype(matmul_dtype)
        b2 = (jnp.zeros((1, Hp), f32)
              .at[0, :H].set(cb2.reshape(-1)).at[0, H:2 * H].set(bb2.reshape(-1)))
        w3 = (jnp.zeros((Hp, OUT), f32)
              .at[:H, :C].set(cw3).at[H:2 * H, C:C + K].set(bw3)).astype(matmul_dtype)
        b3 = (jnp.zeros((1, OUT), f32)
              .at[0, :C].set(cb3.reshape(-1)).at[0, C:C + K].set(bb3.reshape(-1)))
        arrays = (w1, b1, w2, b2, w3, b3)
        meta = dict(mode="compact", D=D, H=H, Hp=Hp, C=C, K=K, OUT=OUT, W1=Hp)
    else:
        # ---- wide: per-head padded hidden; layer 1 and layer 3 fused ----
        Hp = _round_up(H, 128)

        def padw(a, r, c):
            return jnp.pad(a, ((0, r - a.shape[0]), (0, c - a.shape[1])))

        w1 = jnp.concatenate([padw(cw1, D, Hp), padw(bw1, D, Hp)], axis=1).astype(matmul_dtype)
        b1 = jnp.concatenate([padw(cb1.reshape(1, -1), 1, Hp),
                              padw(bb1.reshape(1, -1), 1, Hp)], axis=1)
        cw2p = padw(cw2, Hp, Hp).astype(matmul_dtype)
        bw2p = padw(bw2, Hp, Hp).astype(matmul_dtype)
        cb2p = padw(cb2.reshape(1, -1), 1, Hp)
        bb2p = padw(bb2.reshape(1, -1), 1, Hp)
        # Vertically stacked layer-3 weight: class rows [0,H) -> lanes [0,C),
        # bbox rows [Hp, Hp+H) -> lanes [C, C+K).
        w3 = (jnp.zeros((2 * Hp, OUT), f32)
              .at[:H, :C].set(cw3).at[Hp:Hp + H, C:C + K].set(bw3)).astype(matmul_dtype)
        b3 = (jnp.zeros((1, OUT), f32)
              .at[0, :C].set(cb3.reshape(-1)).at[0, C:C + K].set(bb3.reshape(-1)))
        arrays = (w1, b1, cw2p, cb2p, bw2p, bb2p, w3, b3)
        meta = dict(mode="wide", D=D, H=H, Hp=Hp, C=C, K=K, OUT=OUT, W1=2 * Hp)

    return meta, arrays


# ----------------------------------------------------------------------------
# Forward: pallas_call launcher (no weight repacking here)
# ----------------------------------------------------------------------------
def detector_heads(x, packed, *, tm=512):
    """x: [B, T, D] backbone features (f32 or bf16). Returns (logits, boxes)."""
    meta, weights = packed
    B, T, D = x.shape
    assert D == meta["D"]
    M = B * T
    C, K, OUT, W1, Hp = meta["C"], meta["K"], meta["OUT"], meta["W1"], meta["Hp"]

    # Row tiling: pad M so it divides evenly; tile rows across the grid.
    x2d = x.reshape(M, D)
    tm_eff = min(tm, _round_up(M, 8))
    Mp = _round_up(M, tm_eff)
    if Mp != M:
        x2d = jnp.pad(x2d, ((0, Mp - M), (0, 0)))
    num_tiles = Mp // tm_eff

    if meta["mode"] == "compact":
        kernel = functools.partial(_compact_kernel, num_logits=C)
    else:
        kernel = functools.partial(_wide_kernel, hidden_pad=Hp, num_logits=C)

    def wspec(arr):
        # Weight/bias blocks: full extent, constant index map -> DMA'd once,
        # VMEM-resident; single-buffered (no point double-buffering constants).
        nd = arr.ndim
        return pl.BlockSpec(arr.shape, lambda i: (0,) * nd,
                            pipeline_mode=pl.Buffered(1))

    in_specs = [pl.BlockSpec((tm_eff, D), lambda i: (i, 0))]  # streaming x tile
    in_specs += [wspec(w) for w in weights]
    out_spec = pl.BlockSpec((tm_eff, OUT), lambda i: (i, 0))

    # VMEM budget from the actual block footprint: double-buffered x/out tiles,
    # single-buffered resident weights, f32 intermediates (h1/h2/raw).
    x_bytes = jnp.dtype(x2d.dtype).itemsize
    io_bytes = 2 * tm_eff * (D * x_bytes + OUT * 4)
    weight_bytes = sum(int(w.size) * jnp.dtype(w.dtype).itemsize for w in weights)
    interm_bytes = 4 * tm_eff * (2 * W1 + OUT)
    vmem_limit = int(min(100 * 1024 * 1024,
                         max(16 * 1024 * 1024,
                             2 * (io_bytes + weight_bytes + interm_bytes))))

    # Megacore sharding only pays when each core gets >= 2 real row tiles;
    # otherwise the duplicated resident-weight DMA per core exceeds the gain.
    semantics = ("parallel",) if num_tiles >= 4 else ("arbitrary",)

    l2_flops_n = Hp if meta["mode"] == "wide" else W1
    flops = 2 * Mp * (D * W1 + W1 * l2_flops_n + W1 * OUT)
    bytes_accessed = Mp * D * x_bytes + Mp * OUT * 4 + weight_bytes

    out = pl.pallas_call(
        kernel,
        out_shape=jax.ShapeDtypeStruct((Mp, OUT), jnp.float32),
        grid=(num_tiles,),
        in_specs=in_specs,
        out_specs=out_spec,
        compiler_params=pltpu.CompilerParams(
            dimension_semantics=semantics,
            vmem_limit_bytes=vmem_limit,
        ),
        cost_estimate=pl.CostEstimate(
            flops=flops, transcendentals=Mp * OUT, bytes_accessed=bytes_accessed),
    )(x2d, *weights)

    logits = out[:M, :C].reshape(B, T, C)
    boxes = out[:M, C:C + K].reshape(B, T, K)
    return logits, boxes


# ----------------------------------------------------------------------------
# Demo / self-test
# ----------------------------------------------------------------------------
def init_mlp_params(key, input_dim, hidden_dim, output_dim, num_layers=3):
    """Init matching MLP(input_dim, hidden_dim, output_dim, num_layers); weights [in, out]."""
    dims_in = [input_dim] + [hidden_dim] * (num_layers - 1)
    dims_out = [hidden_dim] * (num_layers - 1) + [output_dim]
    params = []
    for n, k in zip(dims_in, dims_out):
        key, wk, bk = jax.random.split(key, 3)
        w = jax.random.normal(wk, (n, k), dtype=jnp.float32) / jnp.sqrt(float(n))
        b = 0.1 * jax.random.normal(bk, (k,), dtype=jnp.float32)
        params.extend([w, b])
    return key, tuple(params)


def _mlp_ref(x2d, p, cast=None):
    """Reference MLP matching the PyTorch module (optionally bf16 matmul operands)."""
    w1, b1, w2, b2, w3, b3 = p

    def mm(a, w):
        if cast is not None:
            a, w = a.astype(cast), w.astype(cast)
        return jnp.dot(a, w, preferred_element_type=jnp.float32)

    h = jnp.maximum(mm(x2d, w1) + b1, 0.0)
    h = jnp.maximum(mm(h, w2) + b2, 0.0)
    return mm(h, w3) + b3


def _run_case(key, B, T, D, num_classes):
    key, xk = jax.random.split(key)
    x = jax.random.normal(xk, (B, T, D), dtype=jnp.float32)  # stand-in backbone output
    key, cls_params = init_mlp_params(key, D, D, num_classes + 1, num_layers=3)
    key, box_params = init_mlp_params(key, D, D, 4, num_layers=3)

    packed = pack_detector_heads(cls_params, box_params)   # hoisted: pack once
    pred_logits, pred_boxes = detector_heads(x, packed)
    jax.block_until_ready(pred_logits)
    jax.block_until_ready(pred_boxes)

    x2d = x.reshape(B * T, D)
    C = num_classes + 1

    # Tight check against a bf16-matmul-matched reference.
    ref_logits_bf = _mlp_ref(x2d, cls_params, cast=jnp.bfloat16).reshape(B, T, C)
    ref_boxes_bf = jax.nn.sigmoid(_mlp_ref(x2d, box_params, cast=jnp.bfloat16)).reshape(B, T, 4)
    assert jnp.allclose(pred_logits, ref_logits_bf, atol=2e-3, rtol=2e-3)
    assert jnp.allclose(pred_boxes, ref_boxes_bf, atol=2e-3, rtol=2e-3)

    # Module-semantics (full f32) reference, loose tolerance for bf16 matmuls.
    ref_logits = _mlp_ref(x2d, cls_params).reshape(B, T, C)
    ref_boxes = jax.nn.sigmoid(_mlp_ref(x2d, box_params)).reshape(B, T, 4)
    assert jnp.allclose(pred_logits, ref_logits, atol=5e-2, rtol=5e-2)
    assert jnp.allclose(pred_boxes, ref_boxes, atol=5e-2, rtol=5e-2)

    assert pred_logits.shape == (B, T, C)
    assert pred_boxes.shape == (B, T, 4)
    return key


if __name__ == "__main__":
    key = jax.random.PRNGKey(0)
    NUM_CLASSES = 91

    # Small shapes consistent with the module: batch=2, det_token_num=8,
    # embed_dim=32 -> exercises the compact (single 128-lane hidden) path.
    key = _run_case(key, B=2, T=8, D=32, num_classes=NUM_CLASSES)

    # embed_dim=96 (2*H > 128) -> exercises the wide (per-head, fused-l3) path
    # used by realistic configs such as embed_dim=768.
    key = _run_case(key, B=2, T=8, D=96, num_classes=NUM_CLASSES)

    print("KERNEL_OK")
</pallas_src>

<mosaic_0001>
module attributes {stable_mosaic.version = 11 : i64} {
  func.func @_compact_kernel(%arg0: i32, %arg1: memref<16x32xf32, #tpu.memory_space<vmem>>, %arg2: memref<32x128xbf16, #tpu.memory_space<vmem>>, %arg3: memref<1x128xf32, #tpu.memory_space<vmem>>, %arg4: memref<128x128xbf16, #tpu.memory_space<vmem>>, %arg5: memref<1x128xf32, #tpu.memory_space<vmem>>, %arg6: memref<128x128xbf16, #tpu.memory_space<vmem>>, %arg7: memref<1x128xf32, #tpu.memory_space<vmem>>, %arg8: memref<16x128xf32, #tpu.memory_space<vmem>>) attributes {dimension_semantics = [#tpu.dimension_semantics<arbitrary>], iteration_bounds = array<i64: 1>, scalar_prefetch = 0 : i64, scratch_operands = 0 : i64, tpu.core_type = #tpu.core_type<tc>, window_params = [{transform_indices = @transform_0, window_bounds = array<i64: 16, 32>}, {pipeline_mode = #tpu.pipeline_mode<synchronous>, transform_indices = @transform_1, window_bounds = array<i64: 32, 128>}, {pipeline_mode = #tpu.pipeline_mode<synchronous>, transform_indices = @transform_2, window_bounds = array<i64: 1, 128>}, {pipeline_mode = #tpu.pipeline_mode<synchronous>, transform_indices = @transform_3, window_bounds = array<i64: 128, 128>}, {pipeline_mode = #tpu.pipeline_mode<synchronous>, transform_indices = @transform_4, window_bounds = array<i64: 1, 128>}, {pipeline_mode = #tpu.pipeline_mode<synchronous>, transform_indices = @transform_5, window_bounds = array<i64: 128, 128>}, {pipeline_mode = #tpu.pipeline_mode<synchronous>, transform_indices = @transform_6, window_bounds = array<i64: 1, 128>}, {transform_indices = @transform_7, window_bounds = array<i64: 16, 128>}]} {
    %c0 = arith.constant 0 : index
    %c0_0 = arith.constant 0 : index
    %0 = vector.load %arg1[%c0, %c0_0] : memref<16x32xf32, #tpu.memory_space<vmem>>, vector<16x32xf32>
    %1 = arith.truncf %0 : vector<16x32xf32> to vector<16x32xbf16>
    %c0_1 = arith.constant 0 : index
    %c0_2 = arith.constant 0 : index
    %2 = vector.load %arg2[%c0_1, %c0_2] : memref<32x128xbf16, #tpu.memory_space<vmem>>, vector<32x128xbf16>
    %cst = arith.constant dense<0.000000e+00> : vector<16x128xf32>
    %3 = tpu.matmul %1, %2, %cst {dimension_numbers = #tpu.dot_dimension_numbers<[1], [0], [0], [1], [0, 0, 1, 1], [], []>} : vector<16x32xbf16>, vector<32x128xbf16>, vector<16x128xf32> -> vector<16x128xf32>
    %c0_3 = arith.constant 0 : index
    %c0_4 = arith.constant 0 : index
    %4 = vector.load %arg3[%c0_3, %c0_4] : memref<1x128xf32, #tpu.memory_space<vmem>>, vector<1x128xf32>
    %5 = vector.broadcast %4 : vector<1x128xf32> to vector<16x128xf32>
    %6 = arith.addf %3, %5 : vector<16x128xf32>
    %cst_5 = arith.constant 0.000000e+00 : f32
    %7 = vector.broadcast %cst_5 : f32 to vector<16x128xf32>
    %8 = arith.maximumf %6, %7 : vector<16x128xf32>
    %9 = arith.truncf %8 : vector<16x128xf32> to vector<16x128xbf16>
    %c0_6 = arith.constant 0 : index
    %c0_7 = arith.constant 0 : index
    %10 = vector.load %arg4[%c0_6, %c0_7] : memref<128x128xbf16, #tpu.memory_space<vmem>>, vector<128x128xbf16>
    %cst_8 = arith.constant dense<0.000000e+00> : vector<16x128xf32>
    %11 = tpu.matmul %9, %10, %cst_8 {dimension_numbers = #tpu.dot_dimension_numbers<[1], [0], [0], [1], [0, 0, 1, 1], [], []>} : vector<16x128xbf16>, vector<128x128xbf16>, vector<16x128xf32> -> vector<16x128xf32>
    %c0_9 = arith.constant 0 : index
    %c0_10 = arith.constant 0 : index
    %12 = vector.load %arg5[%c0_9, %c0_10] : memref<1x128xf32, #tpu.memory_space<vmem>>, vector<1x128xf32>
    %13 = vector.broadcast %12 : vector<1x128xf32> to vector<16x128xf32>
    %14 = arith.addf %11, %13 : vector<16x128xf32>
    %cst_11 = arith.constant 0.000000e+00 : f32
    %15 = vector.broadcast %cst_11 : f32 to vector<16x128xf32>
    %16 = arith.maximumf %14, %15 : vector<16x128xf32>
    %17 = arith.truncf %16 : vector<16x128xf32> to vector<16x128xbf16>
    %c0_12 = arith.constant 0 : index
    %c0_13 = arith.constant 0 : index
    %18 = vector.load %arg6[%c0_12, %c0_13] : memref<128x128xbf16, #tpu.memory_space<vmem>>, vector<128x128xbf16>
    %cst_14 = arith.constant dense<0.000000e+00> : vector<16x128xf32>
    %19 = tpu.matmul %17, %18, %cst_14 {dimension_numbers = #tpu.dot_dimension_numbers<[1], [0], [0], [1], [0, 0, 1, 1], [], []>} : vector<16x128xbf16>, vector<128x128xbf16>, vector<16x128xf32> -> vector<16x128xf32>
    %c0_15 = arith.constant 0 : index
    %c0_16 = arith.constant 0 : index
    %20 = vector.load %arg7[%c0_15, %c0_16] : memref<1x128xf32, #tpu.memory_space<vmem>>, vector<1x128xf32>
    %21 = vector.broadcast %20 : vector<1x128xf32> to vector<16x128xf32>
    %22 = arith.addf %19, %21 : vector<16x128xf32>
    %23 = tpu.iota {dimensions = array<i32: 1>} : vector<16x128xi32>
    %c92_i32 = arith.constant 92 : i32
    %24 = vector.broadcast %c92_i32 : i32 to vector<16x128xi32>
    %25 = arith.cmpi slt, %23, %24 : vector<16x128xi32>
    %26 = arith.negf %22 : vector<16x128xf32>
    %27 = math.exp %26 : vector<16x128xf32>
    %cst_17 = arith.constant 1.000000e+00 : f32
    %28 = vector.broadcast %cst_17 : f32 to vector<16x128xf32>
    %29 = arith.addf %28, %27 : vector<16x128xf32>
    %30 = arith.divf %28, %29 : vector<16x128xf32>
    %31 = arith.select %25, %22, %30 : vector<16x128xi1>, vector<16x128xf32>
    %c0_18 = arith.constant 0 : index
    %c0_19 = arith.constant 0 : index
    %32 = vector.load %arg8[%c0_18, %c0_19] : memref<16x128xf32, #tpu.memory_space<vmem>>, vector<16x128xf32>
    tpu.vector_store %arg8[%c0_18, %c0_19], %31 {strides = array<i32>} : memref<16x128xf32, #tpu.memory_space<vmem>>, vector<16x128xf32>,
    return
  }
  func.func @transform_0(%arg0: i32) -> (i32, i32) {
    %c0_i32 = arith.constant 0 : i32
    %c0_i32_0 = arith.constant 0 : i32
    return %arg0, %c0_i32 : i32, i32
  }
  func.func @transform_1(%arg0: i32) -> (i32, i32) {
    %c0_i32 = arith.constant 0 : i32
    %c0_i32_0 = arith.constant 0 : i32
    %c0_i32_1 = arith.constant 0 : i32
    return %c0_i32, %c0_i32_0 : i32, i32
  }
  func.func @transform_2(%arg0: i32) -> (i32, i32) {
    %c0_i32 = arith.constant 0 : i32
    %c0_i32_0 = arith.constant 0 : i32
    %c0_i32_1 = arith.constant 0 : i32
    return %c0_i32, %c0_i32_0 : i32, i32
  }
  func.func @transform_3(%arg0: i32) -> (i32, i32) {
    %c0_i32 = arith.constant 0 : i32
    %c0_i32_0 = arith.constant 0 : i32
    %c0_i32_1 = arith.constant 0 : i32
    return %c0_i32, %c0_i32_0 : i32, i32
  }
  func.func @transform_4(%arg0: i32) -> (i32, i32) {
    %c0_i32 = arith.constant 0 : i32
    %c0_i32_0 = arith.constant 0 : i32
    %c0_i32_1 = arith.constant 0 : i32
    return %c0_i32, %c0_i32_0 : i32, i32
  }
  func.func @transform_5(%arg0: i32) -> (i32, i32) {
    %c0_i32 = arith.constant 0 : i32
    %c0_i32_0 = arith.constant 0 : i32
    %c0_i32_1 = arith.constant 0 : i32
    return %c0_i32, %c0_i32_0 : i32, i32
  }
  func.func @transform_6(%arg0: i32) -> (i32, i32) {
    %c0_i32 = arith.constant 0 : i32
    %c0_i32_0 = arith.constant 0 : i32
    %c0_i32_1 = arith.constant 0 : i32
    return %c0_i32, %c0_i32_0 : i32, i32
  }
  func.func @transform_7(%arg0: i32) -> (i32, i32) {
    %c0_i32 = arith.constant 0 : i32
    %c0_i32_0 = arith.constant 0 : i32
    return %arg0, %c0_i32 : i32, i32
  }
}

</mosaic_0001>

<llo_original>
// kernel: tpu_custom_call.1
$region0: #{tpu_custom_call.1}
  #allocation0 [shape = 'u32[]', space=smem, size = 0x4, offset = 0x4, fixed_abs, tag = 'smem constant byte address 0x4 - core index']
  #allocation1 [shape = 'u32[144,128]{1,0:T(1,128)}', space=vmem, size = 0x12000, scoped, tag = 'internal scratch']
  %s0 = inlined_call_operand.hbm [shape: f32[16,32], index: 0, kind: input, shape index: {}]
  %s1 = inlined_call_operand.hbm [shape: bf16[32,128], index: 1, kind: input, shape index: {}]
  %s2 = inlined_call_operand.vmem [shape: f32[1,128], index: 2, kind: input, shape index: {}]
  %s3 = inlined_call_operand.hbm [shape: bf16[128,128], index: 3, kind: input, shape index: {}]
  %s4 = inlined_call_operand.vmem [shape: f32[1,128], index: 4, kind: input, shape index: {}]
  %s5 = inlined_call_operand.hbm [shape: bf16[128,128], index: 5, kind: input, shape index: {}]
  %s6 = inlined_call_operand.vmem [shape: f32[1,128], index: 6, kind: input, shape index: {}]
  %s7 = inlined_call_operand.hbm [shape: f32[16,128], index: 7, kind: output, shape index: {}]
  %s8 = sld [smem:[#allocation0]]
  $region54: #{tpu_custom_call.1} parent=0
    _
  %s10 = ssub.s32 1, %s8
  %s11 = scalar_select 0, %s10, %s8
  $region1: #{tpu_custom_call.1} parent=0
    #allocation2 [shape = 'u8[8192]{0}', space=vmem, size = 0x2000, scoped, tag = 'input window, operand 0, single buffered']
    #allocation3 [shape = 's32[1]{0}', space=sflag, size = 0x4, scoped, tag = 'scoped memory for tpu_custom_call.1']
    #allocation4 [shape = 's32[1]{0}', space=sflag, size = 0x4, scoped, tag = 'scoped memory for tpu_custom_call.1']
    #allocation5 [shape = 'u8[8192]{0}', space=vmem, size = 0x2000, scoped, tag = 'input window, operand 1, single buffered']
    #allocation6 [shape = 's32[1]{0}', space=sflag, size = 0x4, scoped, tag = 'scoped memory for tpu_custom_call.1']
    #allocation7 [shape = 'u8[32768]{0}', space=vmem, size = 0x8000, scoped, tag = 'input window, operand 3, single buffered']
    #allocation8 [shape = 'u8[32768]{0}', space=vmem, size = 0x8000, scoped, tag = 'input window, operand 5, single buffered']
    #allocation9 [shape = 's32[1]{0}', space=sflag, size = 0x4, scoped, tag = 'scoped memory for tpu_custom_call.1']
    #allocation10 [shape = 'u8[8192]{0}', space=vmem, size = 0x2000, scoped, tag = 'output window, operand 0, single buffered']
    %12 = vsyncpa [#allocation3], 0
    %13 = vsyncpa [#allocation6], 0
    %14 = vsyncpa [#allocation9], 0
    %15 = vsyncpa [#allocation4], 0
    // Predicated region
    $region2: #{tpu_custom_call.1} parent=1 // pred_check
      _
    $region3: #{tpu_custom_call.1} parent=1 // pred_check_branch
      %17 = sbr.rel (0) target = $region5
    $region4: #{tpu_custom_call.1} parent=1 // pred_region
      %s19 = ssub.s32 256, 256
      %20 = vsyncadd [#allocation3], %s19
      %s21 = sshll.u32 [#allocation2], 4
      %s22 = int_to_ptr.vmem [resolvable:$true] %s21
      %27 = dma.hbm_to_vmem [thread:$0]  %s0, 256, %s22, [#allocation3], 128, 128, 8
    $region5: #{tpu_custom_call.1} parent=1 // pred_fallthru
      _
    // Predicated region
    $region6: #{tpu_custom_call.1} parent=1 // pred_check
      _
    $region7: #{tpu_custom_call.1} parent=1 // pred_check_branch
      %29 = sbr.rel (0) target = $region9
    $region8: #{tpu_custom_call.1} parent=1 // pred_region
      %s31 = ssub.s32 256, 256
      %32 = vsyncadd [#allocation6], %s31
      %s33 = sshll.u32 [#allocation5], 4
      %s34 = int_to_ptr.vmem [resolvable:$true] %s33
      %39 = dma.hbm_to_vmem [thread:$0]  %s1, 256, %s34, [#allocation6], 64, 64, 4
    $region9: #{tpu_custom_call.1} parent=1 // pred_fallthru
      _
    // Predicated region
    $region10: #{tpu_custom_call.1} parent=1 // pred_check
      _
    $region11: #{tpu_custom_call.1} parent=1 // pred_check_branch
      %41 = sbr.rel (0) target = $region13
    $region12: #{tpu_custom_call.1} parent=1 // pred_region
      _
    $region13: #{tpu_custom_call.1} parent=1 // pred_fallthru
      _
    // Predicated region
    $region14: #{tpu_custom_call.1} parent=1 // pred_check
      _
    $region15: #{tpu_custom_call.1} parent=1 // pred_check_branch
      %43 = sbr.rel (0) target = $region17
    $region16: #{tpu_custom_call.1} parent=1 // pred_region
      %s45 = ssub.s32 1024, 1024
      %46 = vsyncadd [#allocation6], %s45
      %s47 = sshll.u32 [#allocation7], 4
      %s48 = int_to_ptr.vmem [resolvable:$true] %s47
      %53 = dma.hbm_to_vmem [thread:$0]  %s3, 1024, %s48, [#allocation6], 64, 64, 4
    $region17: #{tpu_custom_call.1} parent=1 // pred_fallthru
      _
    // Predicated region
    $region18: #{tpu_custom_call.1} parent=1 // pred_check
      _
    $region19: #{tpu_custom_call.1} parent=1 // pred_check_branch
      %55 = sbr.rel (0) target = $region21
    $region20: #{tpu_custom_call.1} parent=1 // pred_region
      _
    $region21: #{tpu_custom_call.1} parent=1 // pred_fallthru
      _
    // Predicated region
    $region22: #{tpu_custom_call.1} parent=1 // pred_check
      _
    $region23: #{tpu_custom_call.1} parent=1 // pred_check_branch
      %57 = sbr.rel (0) target = $region25
    $region24: #{tpu_custom_call.1} parent=1 // pred_region
      %s59 = ssub.s32 1024, 1024
      %60 = vsyncadd [#allocation9], %s59
      %s61 = sshll.u32 [#allocation8], 4
      %s62 = int_to_ptr.vmem [resolvable:$true] %s61
      %67 = dma.hbm_to_vmem [thread:$0]  %s5, 1024, %s62, [#allocation9], 64, 64, 4
    $region25: #{tpu_custom_call.1} parent=1 // pred_fallthru
      _
    // Predicated region
    $region26: #{tpu_custom_call.1} parent=1 // pred_check
      _
    $region27: #{tpu_custom_call.1} parent=1 // pred_check_branch
      %69 = sbr.rel (0) target = $region29
    $region28: #{tpu_custom_call.1} parent=1 // pred_region
      _
    $region29: #{tpu_custom_call.1} parent=1 // pred_fallthru
      _
    // Predicated region
    $region30: #{tpu_custom_call.1} parent=1 // pred_check
      _
    $region31: #{tpu_custom_call.1} parent=1 // pred_check_branch
      %71 = sbr.rel (0) target = $region33
    $region32: #{tpu_custom_call.1} parent=1 // pred_region
      %72 = dma.done [#allocation3], 256
    $region33: #{tpu_custom_call.1} parent=1 // pred_fallthru
      _
    // Predicated region
    $region34: #{tpu_custom_call.1} parent=1 // pred_check
      _
    $region35: #{tpu_custom_call.1} parent=1 // pred_check_branch
      %74 = sbr.rel (0) target = $region37
    $region36: #{tpu_custom_call.1} parent=1 // pred_region
      %75 = dma.done [#allocation6], 256
    $region37: #{tpu_custom_call.1} parent=1 // pred_fallthru
      _
    // Predicated region
    $region38: #{tpu_custom_call.1} parent=1 // pred_check
      _
    $region39: #{tpu_custom_call.1} parent=1 // pred_check_branch
      %77 = sbr.rel (0) target = $region41
    $region40: #{tpu_custom_call.1} parent=1 // pred_region
      %78 = dma.done [#allocation6], 1024
    $region41: #{tpu_custom_call.1} parent=1 // pred_fallthru
      _
    // Predicated region
    $region42: #{tpu_custom_call.1} parent=1 // pred_check
      _
    $region43: #{tpu_custom_call.1} parent=1 // pred_check_branch
      %80 = sbr.rel (0) target = $region45
    $region44: #{tpu_custom_call.1} parent=1 // pred_region
      %81 = dma.done [#allocation9], 1024
    $region45: #{tpu_custom_call.1} parent=1 // pred_fallthru
      _
    %v83 = vld [vmem:[#allocation2] sm:$0xff]
    %v84 = vld [vmem:[#allocation2 + $0x8] sm:$0xff]
    %v85 = vpack.c.bf16 %v84, %v83
    %v86 = vld [vmem:[#allocation5] sm:$0xf]
    %v87 = vld [vmem:[#allocation5 + $0x4] sm:$0xf]
    %v88 = vld [vmem:[#allocation5 + $0x8] sm:$0xf]
    %v89 = vld [vmem:[#allocation5 + $0xc] sm:$0xf]
    %v90 = vld [vmem:[%s2] sm:$0x1]
    %v92 = vlaneseq
    %v93 = vshrl.u32 %v92, 7
    %v94 = vsub.s32 0, %v93
    %v95 = vrot.slane %v90, %v94
    %v101 = vunpack.c.l.b16 %v86
    %v102 = vunpack.c.l.b16 %v87
    %v103 = vunpack.c.l.b16 %v88
    %v104 = vunpack.c.l.b16 %v89
    %v105 = vpack.c.b16 %v102, %v101
    %v106 = vpack.c.b16 %v104, %v103
    %vm109 = vcmask 261120
    %v111 = vsel %vm109, %v85, 0
    %113 = vmatprep.subr.bf16.mxu0 0
    %114 = vmatpush1.bf16.msra.mxu0 0
    %115 = vmatprep.subr.bf16.mxu0 0
    %116 = vmatpush1.bf16.msra.mxu0 0
    %117 = vmatprep.subr.bf16.mxu0 0
    %118 = vmatpush1.bf16.msra.mxu0 0
    %119 = vmatprep.subr.bf16.mxu0 0
    %120 = vmatpush1.bf16.msra.mxu0 0
    %121 = vmatprep.subr.bf16.mxu0 0
    %122 = vmatpush1.bf16.msra.mxu0 0
    %123 = vmatprep.subr.bf16.mxu0 0
    %124 = vmatpush1.bf16.msra.mxu0 0
    %125 = vmatprep.subr.bf16.mxu0 0
    %126 = vmatpush1.bf16.msra.mxu0 %v106
    %127 = vmatprep.subr.bf16.mxu0 0
    %128 = vmatpush1.bf16.msra.mxu0 %v105
    %129 = vmatprep.subr.bf16.mxu0 0
    %130 = vmatpush2.bf16.msra.mxu0 0
    %131 = vmatprep.subr.bf16.mxu0 0
    %132 = vmatpush2.bf16.msra.mxu0 0
    %133 = vmatprep.subr.bf16.mxu0 0
    %134 = vmatpush2.bf16.msra.mxu0 0
    %135 = vmatprep.subr.bf16.mxu0 0
    %136 = vmatpush2.bf16.msra.mxu0 0
    %137 = vmatprep.subr.bf16.mxu0 0
    %138 = vmatpush2.bf16.msra.mxu0 0
    %139 = vmatprep.subr.bf16.mxu0 0
    %140 = vmatpush2.bf16.msra.mxu0 0
    %141 = vmatprep.subr.bf16.mxu0 0
    %142 = vmatpush2.bf16.msra.mxu0 0
    %143 = vmatprep.subr.bf16.mxu0 0
    %144 = vmatpush2.bf16.msra.mxu0 0
    %145 = vmatprep.mubr.bf16.mxu0 0
    %146 = vmatmul.mubr.bf16.gmra.mxu0 %v111
    %v147 = vpop.f32.mrf.mxu0
    %v148 = vadd.f32 %v95, %v147
    %v149 = vpop.f32.mrf.mxu0
    %v150 = vpop.f32.mrf.mxu0
    %v151 = vadd.f32 %v95, %v150
    %v152 = vpop.f32.mrf.mxu0
    %153 = vdwg.mxu0
    %v154 = vmax.f32 %v148, 0.0
    %v155 = vmax.f32 %v151, 0.0
    %v156 = vpack.c.bf16 %v155, %v154
    %v157 = vld [vmem:[#allocation7] sm:$0xf]
    %v158 = vld [vmem:[#allocation7 + $0x4] sm:$0xf]
    %v159 = vld [vmem:[#allocation7 + $0x8] sm:$0xf]
    %v160 = vld [vmem:[#allocation7 + $0xc] sm:$0xf]
    %v161 = vld [vmem:[#allocation7 + $0x10] sm:$0xf]
    %v162 = vld [vmem:[#allocation7 + $0x14] sm:$0xf]
    %v163 = vld [vmem:[#allocation7 + $0x18] sm:$0xf]
    %v164 = vld [vmem:[#allocation7 + $0x1c] sm:$0xf]
    %v165 = vld [vmem:[#allocation7 + $0x20] sm:$0xf]
    %v166 = vld [vmem:[#allocation7 + $0x24] sm:$0xf]
    %v167 = vld [vmem:[#allocation7 + $0x28] sm:$0xf]
    %v168 = vld [vmem:[#allocation7 + $0x2c] sm:$0xf]
    %v169 = vld [vmem:[#allocation7 + $0x30] sm:$0xf]
    %v170 = vld [vmem:[#allocation7 + $0x34] sm:$0xf]
    %v171 = vld [vmem:[#allocation7 + $0x38] sm:$0xf]
    %v172 = vld [vmem:[#allocation7 + $0x3c] sm:$0xf]
    %v173 = vld [vmem:[%s4] sm:$0x1]
    %v175 = vlaneseq
    %v176 = vshrl.u32 %v175, 7
    %v177 = vsub.s32 0, %v176
    %v178 = vrot.slane %v173, %v177
    %v196 = vunpack.c.l.b16 %v157
    %v197 = vunpack.c.l.b16 %v158
    %v198 = vunpack.c.l.b16 %v159
    %v199 = vunpack.c.l.b16 %v160
    %v200 = vunpack.c.l.b16 %v161
    %v201 = vunpack.c.l.b16 %v162
    %v202 = vunpack.c.l.b16 %v163
    %v203 = vunpack.c.l.b16 %v164
    %v204 = vunpack.c.l.b16 %v165
    %v205 = vunpack.c.l.b16 %v166
    %v206 = vunpack.c.l.b16 %v167
    %v207 = vunpack.c.l.b16 %v168
    %v208 = vunpack.c.l.b16 %v169
    %v209 = vunpack.c.l.b16 %v170
    %v210 = vunpack.c.l.b16 %v171
    %v211 = vunpack.c.l.b16 %v172
    %v212 = vpack.c.b16 %v197, %v196
    %v213 = vpack.c.b16 %v199, %v198
    %v214 = vpack.c.b16 %v201, %v200
    %v215 = vpack.c.b16 %v203, %v202
    %v216 = vpack.c.b16 %v205, %v204
    %v217 = vpack.c.b16 %v207, %v206
    %v218 = vpack.c.b16 %v209, %v208
    %v219 = vpack.c.b16 %v211, %v210
    %228 = vmatprep.subr.bf16.mxu0 0
    %229 = vmatpush1.bf16.msra.mxu0 %v219
    %230 = vmatprep.subr.bf16.mxu0 0
    %231 = vmatpush1.bf16.msra.mxu0 %v218
    %232 = vmatprep.subr.bf16.mxu0 0
    %233 = vmatpush1.bf16.msra.mxu0 %v217
    %234 = vmatprep.subr.bf16.mxu0 0
    %235 = vmatpush1.bf16.msra.mxu0 %v216
    %236 = vmatprep.subr.bf16.mxu0 0
    %237 = vmatpush1.bf16.msra.mxu0 %v215
    %238 = vmatprep.subr.bf16.mxu0 0
    %239 = vmatpush1.bf16.msra.mxu0 %v214
    %240 = vmatprep.subr.bf16.mxu0 0
    %241 = vmatpush1.bf16.msra.mxu0 %v213
    %242 = vmatprep.subr.bf16.mxu0 0
    %243 = vmatpush1.bf16.msra.mxu0 %v212
    %244 = vmatprep.subr.bf16.mxu0 0
    %245 = vmatpush2.bf16.msra.mxu0 0
    %246 = vmatprep.subr.bf16.mxu0 0
    %247 = vmatpush2.bf16.msra.mxu0 0
    %248 = vmatprep.subr.bf16.mxu0 0
    %249 = vmatpush2.bf16.msra.mxu0 0
    %250 = vmatprep.subr.bf16.mxu0 0
    %251 = vmatpush2.bf16.msra.mxu0 0
    %252 = vmatprep.subr.bf16.mxu0 0
    %253 = vmatpush2.bf16.msra.mxu0 0
    %254 = vmatprep.subr.bf16.mxu0 0
    %255 = vmatpush2.bf16.msra.mxu0 0
    %256 = vmatprep.subr.bf16.mxu0 0
    %257 = vmatpush2.bf16.msra.mxu0 0
    %258 = vmatprep.subr.bf16.mxu0 0
    %259 = vmatpush2.bf16.msra.mxu0 0
    %260 = vmatprep.mubr.bf16.mxu0 0
    %261 = vmatmul.mubr.bf16.gmra.mxu0 %v156
    %v262 = vpop.f32.mrf.mxu0
    %v263 = vadd.f32 %v178, %v262
    %v264 = vpop.f32.mrf.mxu0
    %v265 = vpop.f32.mrf.mxu0
    %v266 = vadd.f32 %v178, %v265
    %v267 = vpop.f32.mrf.mxu0
    %268 = vdwg.mxu0
    %v269 = vmax.f32 %v263, 0.0
    %v270 = vmax.f32 %v266, 0.0
    %v271 = vpack.c.bf16 %v270, %v269
    %v272 = vld [vmem:[#allocation8] sm:$0xf]
    %v273 = vld [vmem:[#allocation8 + $0x4] sm:$0xf]
    %v274 = vld [vmem:[#allocation8 + $0x8] sm:$0xf]
    %v275 = vld [vmem:[#allocation8 + $0xc] sm:$0xf]
    %v276 = vld [vmem:[#allocation8 + $0x10] sm:$0xf]
    %v277 = vld [vmem:[#allocation8 + $0x14] sm:$0xf]
    %v278 = vld [vmem:[#allocation8 + $0x18] sm:$0xf]
    %v279 = vld [vmem:[#allocation8 + $0x1c] sm:$0xf]
    %v280 = vld [vmem:[#allocation8 + $0x20] sm:$0xf]
    %v281 = vld [vmem:[#allocation8 + $0x24] sm:$0xf]
    %v282 = vld [vmem:[#allocation8 + $0x28] sm:$0xf]
    %v283 = vld [vmem:[#allocation8 + $0x2c] sm:$0xf]
    %v284 = vld [vmem:[#allocation8 + $0x30] sm:$0xf]
    %v285 = vld [vmem:[#allocation8 + $0x34] sm:$0xf]
    %v286 = vld [vmem:[#allocation8 + $0x38] sm:$0xf]
    %v287 = vld [vmem:[#allocation8 + $0x3c] sm:$0xf]
    %v288 = vld [vmem:[%s6] sm:$0x1]
    %v290 = vlaneseq
    %v291 = vshrl.u32 %v290, 7
    %v292 = vsub.s32 0, %v291
    %v293 = vrot.slane %v288, %v292
    %v311 = vunpack.c.l.b16 %v272
    %v312 = vunpack.c.l.b16 %v273
    %v313 = vunpack.c.l.b16 %v274
    %v314 = vunpack.c.l.b16 %v275
    %v315 = vunpack.c.l.b16 %v276
    %v316 = vunpack.c.l.b16 %v277
    %v317 = vunpack.c.l.b16 %v278
    %v318 = vunpack.c.l.b16 %v279
    %v319 = vunpack.c.l.b16 %v280
    %v320 = vunpack.c.l.b16 %v281
    %v321 = vunpack.c.l.b16 %v282
    %v322 = vunpack.c.l.b16 %v283
    %v323 = vunpack.c.l.b16 %v284
    %v324 = vunpack.c.l.b16 %v285
    %v325 = vunpack.c.l.b16 %v286
    %v326 = vunpack.c.l.b16 %v287
    %v327 = vpack.c.b16 %v312, %v311
    %v328 = vpack.c.b16 %v314, %v313
    %v329 = vpack.c.b16 %v316, %v315
    %v330 = vpack.c.b16 %v318, %v317
    %v331 = vpack.c.b16 %v320, %v319
    %v332 = vpack.c.b16 %v322, %v321
    %v333 = vpack.c.b16 %v324, %v323
    %v334 = vpack.c.b16 %v326, %v325
    %343 = vmatprep.subr.bf16.mxu0 0
    %344 = vmatpush1.bf16.msra.mxu0 %v334
    %345 = vmatprep.subr.bf16.mxu0 0
    %346 = vmatpush1.bf16.msra.mxu0 %v333
    %347 = vmatprep.subr.bf16.mxu0 0
    %348 = vmatpush1.bf16.msra.mxu0 %v332
    %349 = vmatprep.subr.bf16.mxu0 0
    %350 = vmatpush1.bf16.msra.mxu0 %v331
    %351 = vmatprep.subr.bf16.mxu0 0
    %352 = vmatpush1.bf16.msra.mxu0 %v330
    %353 = vmatprep.subr.bf16.mxu0 0
    %354 = vmatpush1.bf16.msra.mxu0 %v329
    %355 = vmatprep.subr.bf16.mxu0 0
    %356 = vmatpush1.bf16.msra.mxu0 %v328
    %357 = vmatprep.subr.bf16.mxu0 0
    %358 = vmatpush1.bf16.msra.mxu0 %v327
    %359 = vmatprep.subr.bf16.mxu0 0
    %360 = vmatpush2.bf16.msra.mxu0 0
    %361 = vmatprep.subr.bf16.mxu0 0
    %362 = vmatpush2.bf16.msra.mxu0 0
    %363 = vmatprep.subr.bf16.mxu0 0
    %364 = vmatpush2.bf16.msra.mxu0 0
    %365 = vmatprep.subr.bf16.mxu0 0
    %366 = vmatpush2.bf16.msra.mxu0 0
    %367 = vmatprep.subr.bf16.mxu0 0
    %368 = vmatpush2.bf16.msra.mxu0 0
    %369 = vmatprep.subr.bf16.mxu0 0
    %370 = vmatpush2.bf16.msra.mxu0 0
    %371 = vmatprep.subr.bf16.mxu0 0
    %372 = vmatpush2.bf16.msra.mxu0 0
    %373 = vmatprep.subr.bf16.mxu0 0
    %374 = vmatpush2.bf16.msra.mxu0 0
    %375 = vmatprep.mubr.bf16.mxu0 0
    %376 = vmatmul.mubr.bf16.gmra.mxu0 %v271
    %v377 = vpop.f32.mrf.mxu0
    %v378 = vadd.f32 %v293, %v377
    %v379 = vpop.f32.mrf.mxu0
    %v380 = vpop.f32.mrf.mxu0
    %v381 = vadd.f32 %v293, %v380
    %v382 = vpop.f32.mrf.mxu0
    %383 = vdwg.mxu0
    %v384 = vlaneseq
    %v385 = vand.u32 %v384, 127
    %vm386 = vcmp.lt.s32.totalorder %v385, 92
    %v387 = vxor.u32 %v378, 2147483648
    %v388 = vxor.u32 %v381, 2147483648
    %v389 = vmul.f32 %v387, 1.442695
    %v390 = vpow.pop %v389
    %v391 = vmul.f32 %v388, 1.442695
    %v392 = vpow.pop %v391
    %v393 = vadd.f32 %v390, 1.0
    %v394 = vadd.f32 %v392, 1.0
    %v395 = vrcp.pop %v393
    %v396 = vmul.f32 1.0, %v395
    %v397 = vrcp.pop %v394
    %v398 = vmul.f32 1.0, %v397
    %v399 = vsel %vm386, %v378, %v396
    %v400 = vsel %vm386, %v381, %v398
    %401 = vst [vmem:[#allocation10] sm:$0xff] %v399
    %402 = vst [vmem:[#allocation10 + $0x8] sm:$0xff] %v400
    // Predicated region
    $region46: #{tpu_custom_call.1} parent=1 // pred_check
      _
    $region47: #{tpu_custom_call.1} parent=1 // pred_check_branch
      %404 = sbr.rel (0) target = $region49
    $region48: #{tpu_custom_call.1} parent=1 // pred_region
      %s406 = ssub.s32 256, 256
      %407 = vsyncadd [#allocation4], %s406
      %s408 = sshll.u32 [#allocation10], 4
      %s409 = int_to_ptr.vmem [resolvable:$true] %s408
      %414 = dma.vmem_to_hbm [thread:$0]  %s409, 256, %s7, [#allocation4], 128, 128, 8
    $region49: #{tpu_custom_call.1} parent=1 // pred_fallthru
      _
    // Predicated region
    $region50: #{tpu_custom_call.1} parent=1 // pred_check
      _
    $region51: #{tpu_custom_call.1} parent=1 // pred_check_branch
      %416 = sbr.rel (0) target = $region53
    $region52: #{tpu_custom_call.1} parent=1 // pred_region
      %417 = dma.done [#allocation4], 256
    $region53: #{tpu_custom_call.1} parent=1 // pred_fallthru
      _
    %418 = vsyncpa [#allocation3], 1
    %419 = vsyncpa [#allocation6], 1
    %420 = vsyncpa [#allocation9], 1
    %421 = vsyncpa [#allocation4], 1

</llo_original>
